<compile_context>
chip_gen: v6e
topology: v6e:2x2x1
jax: 0.10.0
libtpu: 0.0.40
codegen_flags: <defaults>
</compile_context>

<pallas_src>
import functools

import jax
import jax.numpy as jnp
from jax.experimental import pallas as pl
from jax.experimental.pallas import tpu as pltpu


def _simam_kernel(x_ref, o_ref, *, inv_hw, inv_n, e_lambda):
    # x_ref: (TILE_ROWS, HW) -- each row is one (b, c) plane flattened over H*W.
    x = x_ref[...].astype(jnp.float32)

    # Two independent row reductions (can overlap in the XLU pipeline).
    sx = jnp.sum(x, axis=-1, keepdims=True)           # sum(x)
    sxx = jnp.sum(x * x, axis=-1, keepdims=True)      # sum(x^2)

    mu = sx * inv_hw                                   # per-row mean
    # sum((x - mu)^2) = sum(x^2) - hw * mu^2 ; clamp for numerical safety.
    s = jnp.maximum(sxx - sx * mu, 0.0)

    d = (x - mu) * (x - mu)                            # (x - mu)^2 (numerator)

    # denom is per-row (T, 1): an exact reciprocal here is negligible work.
    denom = 4.0 * (s * inv_n + e_lambda)
    y = d * pl.reciprocal(denom, approx=False) + 0.5

    # Logistic lowers to the EUP (otherwise-idle slot) instead of a full-tile
    # VALU divide.
    attn = jax.nn.sigmoid(y)

    o_ref[...] = (x * attn).astype(o_ref.dtype)


def _choose_tile_rows(rows, hw):
    """Pick the row-tile: big enough to amortize per-step overhead, small
    enough that double-buffered in/out + f32 temps fit v7x's 64 MiB VMEM."""
    budget_bytes = 4 * 1024 * 1024                     # ~4 MiB f32 per block
    max_rows = max(8, (budget_bytes // (hw * 4)) // 8 * 8)
    rows_aligned = ((rows + 7) // 8) * 8
    tile = min(max_rows, rows_aligned)
    # If one block would cover everything but there is enough work, split into
    # >= 2 grid steps so the 'parallel' axis can shard across v7x's 2 TCs.
    if tile >= rows_aligned and rows > 8:
        tile = max(8, (((rows + 1) // 2) + 7) // 8 * 8)
    return tile


def simam(x, e_lambda=1e-4):
    """SimAM forward. x: (B, C, H, W) array. Returns same shape/dtype."""
    b, c, h, w = x.shape
    hw = h * w
    rows = b * c
    # Guard H*W == 1 (the PyTorch reference would divide by zero there).
    n = max(hw - 1, 1)

    x2d = x.reshape(rows, hw)

    tile_rows = _choose_tile_rows(rows, hw)
    grid = (pl.cdiv(rows, tile_rows),)

    kernel = functools.partial(
        _simam_kernel,
        inv_hw=1.0 / float(hw),
        inv_n=1.0 / float(n),
        e_lambda=float(e_lambda),
    )

    itemsize = x.dtype.itemsize
    cost = pl.CostEstimate(
        flops=10 * rows * hw,
        transcendentals=rows * hw,
        bytes_accessed=2 * rows * hw * itemsize,
    )

    out2d = pl.pallas_call(
        kernel,
        out_shape=jax.ShapeDtypeStruct((rows, hw), x.dtype),
        grid_spec=pltpu.PrefetchScalarGridSpec(
            num_scalar_prefetch=0,
            grid=grid,
            in_specs=[pl.BlockSpec((tile_rows, hw), lambda i: (i, 0))],
            out_specs=pl.BlockSpec((tile_rows, hw), lambda i: (i, 0)),
        ),
        compiler_params=pltpu.CompilerParams(
            dimension_semantics=("parallel",),
            vmem_limit_bytes=64 * 1024 * 1024,
        ),
        cost_estimate=cost,
    )(x2d)

    return out2d.reshape(b, c, h, w)


def simam_ref(x, e_lambda=1e-4):
    """Pure-JAX reference mirroring the PyTorch module."""
    b, c, h, w = x.shape
    n = w * h - 1
    mu = jnp.mean(x, axis=(2, 3), keepdims=True)
    d = (x - mu) ** 2
    y = d / (4.0 * (jnp.sum(d, axis=(2, 3), keepdims=True) / n + e_lambda)) + 0.5
    return x * jax.nn.sigmoid(y)


if __name__ == "__main__":
    key = jax.random.PRNGKey(0)
    x = jax.random.normal(key, (2, 4, 16, 16), dtype=jnp.float32)

    out = simam(x)
    out = jax.block_until_ready(out)

    ref = simam_ref(x)
    assert out.shape == x.shape and out.dtype == x.dtype
    assert jnp.allclose(out, ref, atol=1e-5, rtol=1e-5)

    print("KERNEL_OK")
</pallas_src>

<mosaic_0001>
module attributes {stable_mosaic.version = 11 : i64} {
  func.func @_simam_kernel(%arg0: i32, %arg1: memref<8x256xf32, #tpu.memory_space<vmem>>, %arg2: memref<8x256xf32, #tpu.memory_space<vmem>>) attributes {dimension_semantics = [#tpu.dimension_semantics<parallel>], iteration_bounds = array<i64: 1>, scalar_prefetch = 0 : i64, scratch_operands = 0 : i64, tpu.core_type = #tpu.core_type<tc>, window_params = [{transform_indices = @transform_0, window_bounds = array<i64: 8, 256>}, {transform_indices = @transform_1, window_bounds = array<i64: 8, 256>}]} {
    %c0 = arith.constant 0 : index
    %c0_0 = arith.constant 0 : index
    %0 = vector.load %arg1[%c0, %c0_0] : memref<8x256xf32, #tpu.memory_space<vmem>>, vector<8x256xf32>
    %cst = arith.constant dense<0.000000e+00> : vector<8xf32>
    %1 = vector.multi_reduction <add>, %0, %cst [1] : vector<8x256xf32> to vector<8xf32>
    %2 = vector.shape_cast %1 : vector<8xf32> to vector<8x1xf32>
    %3 = arith.mulf %0, %0 : vector<8x256xf32>
    %cst_1 = arith.constant dense<0.000000e+00> : vector<8xf32>
    %4 = vector.multi_reduction <add>, %3, %cst_1 [1] : vector<8x256xf32> to vector<8xf32>
    %5 = vector.shape_cast %4 : vector<8xf32> to vector<8x1xf32>
    %cst_2 = arith.constant 3.906250e-03 : f32
    %6 = vector.broadcast %cst_2 : f32 to vector<8x1xf32>
    %7 = arith.mulf %2, %6 : vector<8x1xf32>
    %8 = arith.mulf %2, %7 : vector<8x1xf32>
    %9 = arith.subf %5, %8 : vector<8x1xf32>
    %cst_3 = arith.constant 0.000000e+00 : f32
    %10 = vector.broadcast %cst_3 : f32 to vector<8x1xf32>
    %11 = arith.maximumf %9, %10 : vector<8x1xf32>
    %12 = vector.broadcast %7 : vector<8x1xf32> to vector<8x256xf32>
    %13 = arith.subf %0, %12 : vector<8x256xf32>
    %14 = vector.broadcast %7 : vector<8x1xf32> to vector<8x256xf32>
    %15 = arith.subf %0, %14 : vector<8x256xf32>
    %16 = arith.mulf %13, %15 : vector<8x256xf32>
    %cst_4 = arith.constant 0.00392156886 : f32
    %17 = vector.broadcast %cst_4 : f32 to vector<8x1xf32>
    %18 = arith.mulf %11, %17 : vector<8x1xf32>
    %cst_5 = arith.constant 9.99999974E-5 : f32
    %19 = vector.broadcast %cst_5 : f32 to vector<8x1xf32>
    %20 = arith.addf %18, %19 : vector<8x1xf32>
    %cst_6 = arith.constant 4.000000e+00 : f32
    %21 = vector.broadcast %cst_6 : f32 to vector<8x1xf32>
    %22 = arith.mulf %21, %20 : vector<8x1xf32>
    %23 = tpu.reciprocal %22 : vector<8x1xf32> -> vector<8x1xf32>
    %24 = vector.broadcast %23 : vector<8x1xf32> to vector<8x256xf32>
    %25 = arith.mulf %16, %24 : vector<8x256xf32>
    %cst_7 = arith.constant 5.000000e-01 : f32
    %26 = vector.broadcast %cst_7 : f32 to vector<8x256xf32>
    %27 = arith.addf %25, %26 : vector<8x256xf32>
    %28 = arith.negf %27 : vector<8x256xf32>
    %29 = math.exp %28 : vector<8x256xf32>
    %cst_8 = arith.constant 1.000000e+00 : f32
    %30 = vector.broadcast %cst_8 : f32 to vector<8x256xf32>
    %31 = arith.addf %30, %29 : vector<8x256xf32>
    %32 = arith.divf %30, %31 : vector<8x256xf32>
    %33 = arith.mulf %0, %32 : vector<8x256xf32>
    %c0_9 = arith.constant 0 : index
    %c0_10 = arith.constant 0 : index
    %34 = vector.load %arg2[%c0_9, %c0_10] : memref<8x256xf32, #tpu.memory_space<vmem>>, vector<8x256xf32>
    tpu.vector_store %arg2[%c0_9, %c0_10], %33 {strides = array<i32>} : memref<8x256xf32, #tpu.memory_space<vmem>>, vector<8x256xf32>,
    return
  }
  func.func @transform_0(%arg0: i32) -> (i32, i32) {
    %c0_i32 = arith.constant 0 : i32
    %c0_i32_0 = arith.constant 0 : i32
    return %arg0, %c0_i32 : i32, i32
  }
  func.func @transform_1(%arg0: i32) -> (i32, i32) {
    %c0_i32 = arith.constant 0 : i32
    %c0_i32_0 = arith.constant 0 : i32
    return %arg0, %c0_i32 : i32, i32
  }
}

</mosaic_0001>

<llo_original>
// kernel: tpu_custom_call.1
$region0: #{tpu_custom_call.1}
  #allocation0 [shape = 'u32[]', space=smem, size = 0x4, offset = 0x4, fixed_abs, tag = 'smem constant byte address 0x4 - core index']
  #allocation1 [shape = 'u32[144,128]{1,0:T(1,128)}', space=vmem, size = 0x12000, scoped, tag = 'internal scratch']
  %s0 = inlined_call_operand.hbm [shape: f32[8,256], index: 0, kind: input, shape index: {}]
  %s1 = inlined_call_operand.hbm [shape: f32[8,256], index: 1, kind: output, shape index: {}]
  %s2 = sld [smem:[#allocation0]]
  $region18: #{tpu_custom_call.1} parent=0
    _
  %s4 = ssub.s32 1, %s2
  %s5 = scalar_select 0, %s4, %s2
  $region1: #{tpu_custom_call.1} parent=0
    #allocation2 [shape = 'u8[8192]{0}', space=vmem, size = 0x2000, scoped, tag = 'input window, operand 0, single buffered']
    #allocation3 [shape = 's32[1]{0}', space=sflag, size = 0x4, scoped, tag = 'scoped memory for tpu_custom_call.1']
    #allocation4 [shape = 's32[1]{0}', space=sflag, size = 0x4, scoped, tag = 'scoped memory for tpu_custom_call.1']
    #allocation5 [shape = 'u8[8192]{0}', space=vmem, size = 0x2000, scoped, tag = 'output window, operand 0, single buffered']
    %6 = vsyncpa [#allocation3], 0
    %7 = vsyncpa [#allocation4], 0
    // Predicated region
    $region2: #{tpu_custom_call.1} parent=1 // pred_check
      _
    $region3: #{tpu_custom_call.1} parent=1 // pred_check_branch
      %9 = sbr.rel (0) target = $region5
    $region4: #{tpu_custom_call.1} parent=1 // pred_region
      %s11 = ssub.s32 256, 256
      %12 = vsyncadd [#allocation3], %s11
      %s14 = sshll.u32 [#allocation2], 4
      %s15 = int_to_ptr.vmem [resolvable:$true] %s14
      %17 = dma.hbm_to_vmem [thread:$0]  %s0, 256, %s15, [#allocation3]
    $region5: #{tpu_custom_call.1} parent=1 // pred_fallthru
      _
    // Predicated region
    $region6: #{tpu_custom_call.1} parent=1 // pred_check
      _
    $region7: #{tpu_custom_call.1} parent=1 // pred_check_branch
      %19 = sbr.rel (0) target = $region9
    $region8: #{tpu_custom_call.1} parent=1 // pred_region
      %20 = dma.done [#allocation3], 256
    $region9: #{tpu_custom_call.1} parent=1 // pred_fallthru
      _
    %v21 = vld [vmem:[#allocation2] sm:$0xff]
    %v22 = vld [vmem:[#allocation2 + $0x8] sm:$0xff]
    %v23 = vadd.f32 %v21, %v22
    %24 = vadd.xlane.f32.xlu0 %v23
    %v25 = vpop.xlane.xlu0 %24
    %v26 = vmul.f32 %v21, %v21
    %v27 = vmul.f32 %v22, %v22
    %v28 = vadd.f32 %v26, %v27
    %29 = vadd.xlane.f32.xlu0 %v28
    %v30 = vpop.xlane.xlu0 %29
    %v31 = vmul.f32 %v25, 0.00390625
    %v32 = vmul.f32 %v25, %v31
    %v33 = vsub.f32 %v30, %v32
    %v34 = vmax.f32 %v33, 0.0
    %v35 = vsub.f32 %v21, %v31
    %v36 = vsub.f32 %v22, %v31
    %v37 = vmul.f32 %v35, %v35
    %v38 = vmul.f32 %v36, %v36
    %v39 = vmul.f32 %v34, 0.003921569
    %v40 = vadd.f32 %v39, 0.0001
    %v41 = vmul.f32 %v40, 4.0
    %v42 = vrcp.pop %v41
    %v43 = vmul.f32 %v37, %v42
    %v44 = vmul.f32 %v38, %v42
    %v45 = vadd.f32 %v43, 0.5
    %v46 = vadd.f32 %v44, 0.5
    %v47 = vxor.u32 %v45, 2147483648
    %v48 = vxor.u32 %v46, 2147483648
    %v49 = vmul.f32 %v47, 1.442695
    %v50 = vpow.pop %v49
    %v51 = vmul.f32 %v48, 1.442695
    %v52 = vpow.pop %v51
    %v53 = vadd.f32 %v50, 1.0
    %v54 = vadd.f32 %v52, 1.0
    %v55 = vrcp.pop %v53
    %v56 = vmul.f32 1.0, %v55
    %v57 = vrcp.pop %v54
    %v58 = vmul.f32 1.0, %v57
    %v59 = vmul.f32 %v21, %v56
    %v60 = vmul.f32 %v22, %v58
    %61 = vst [vmem:[#allocation5] sm:$0xff] %v59
    %62 = vst [vmem:[#allocation5 + $0x8] sm:$0xff] %v60
    // Predicated region
    $region10: #{tpu_custom_call.1} parent=1 // pred_check
      _
    $region11: #{tpu_custom_call.1} parent=1 // pred_check_branch
      %64 = sbr.rel (0) target = $region13
    $region12: #{tpu_custom_call.1} parent=1 // pred_region
      %s66 = ssub.s32 256, 256
      %67 = vsyncadd [#allocation4], %s66
      %s69 = sshll.u32 [#allocation5], 4
      %s70 = int_to_ptr.vmem [resolvable:$true] %s69
      %72 = dma.vmem_to_hbm [thread:$0]  %s70, 256, %s1, [#allocation4]
    $region13: #{tpu_custom_call.1} parent=1 // pred_fallthru
      _
    // Predicated region
    $region14: #{tpu_custom_call.1} parent=1 // pred_check
      _
    $region15: #{tpu_custom_call.1} parent=1 // pred_check_branch
      %74 = sbr.rel (0) target = $region17
    $region16: #{tpu_custom_call.1} parent=1 // pred_region
      %75 = dma.done [#allocation4], 256
    $region17: #{tpu_custom_call.1} parent=1 // pred_fallthru
      _
    %76 = vsyncpa [#allocation3], 1
    %77 = vsyncpa [#allocation4], 1

</llo_original>
